<compile_context>
chip_gen: v5e
topology: v5e:2x2
jax: 0.10.0
libtpu: 0.0.40
codegen_flags: <defaults>
</compile_context>

<pallas_src>
import jax
import jax.numpy as jnp
from jax.experimental import pallas as pl
from jax.experimental.pallas import tpu as pltpu


LANES = 512          # lane width per block (multiple of 128 -> lane-dense)
MAX_ROW_BLOCK = 256  # sublane rows per block; 256*512*4B = 512 KiB per buffer


def _tonemap_kernel(x_ref, e_ref, o_ref):
    # x_ref/e_ref/o_ref: (row_block, LANES) fully dense f32 tiles.
    o_ref[...] = jax.nn.sigmoid(x_ref[...] + e_ref[...])


def _round_up(x: int, m: int) -> int:
    return ((x + m - 1) // m) * m


def tonemapper_forward(rgb_h_ln: jax.Array, exps: jax.Array) -> jax.Array:
    """Pallas implementation of ToneMapper.forward.

    rgb_h_ln: (B, N, 3) float32 log-radiance
    exps:     broadcastable to (B, N, 1) float32 exposure (per ray)
    returns:  (B, N, 3) float32 tone-mapped color
    """
    B, N, C = rgb_h_ln.shape
    assert C == 3, "expects 3 color channels"
    dtype = rgb_h_ln.dtype
    M = B * N
    T = 3 * M  # total elements

    # Broadcast the per-ray exposure over the 3 channels once (cheap,
    # fuses with the pad below), then flatten both operands contiguously.
    e_full = jnp.broadcast_to(exps.astype(dtype), (B, N, 3)).reshape(T)
    x_full = rgb_h_ln.reshape(T)

    # Fully (8,128)-dense 2D layout: (rows, LANES).
    rows = pl.cdiv(T, LANES)
    row_block = min(MAX_ROW_BLOCK, _round_up(rows, 8))  # multiple of 8
    rows_pad = _round_up(rows, row_block)
    T_pad = rows_pad * LANES

    if T_pad != T:
        # Single pad on the final flat layout (sigmoid of the zero padding is
        # computed but sliced off below).
        x_full = jnp.pad(x_full, (0, T_pad - T))
        e_full = jnp.pad(e_full, (0, T_pad - T))

    x2 = x_full.reshape(rows_pad, LANES)
    e2 = e_full.reshape(rows_pad, LANES)

    grid = (rows_pad // row_block,)

    out2 = pl.pallas_call(
        _tonemap_kernel,
        out_shape=jax.ShapeDtypeStruct((rows_pad, LANES), dtype),
        grid=grid,
        in_specs=[
            pl.BlockSpec((row_block, LANES), lambda i: (i, 0)),
            pl.BlockSpec((row_block, LANES), lambda i: (i, 0)),
        ],
        out_specs=pl.BlockSpec((row_block, LANES), lambda i: (i, 0)),
        compiler_params=pltpu.CompilerParams(
            dimension_semantics=("parallel",),  # megacore-shardable on v7x
        ),
        cost_estimate=pl.CostEstimate(
            flops=2 * T,
            transcendentals=T,
            bytes_accessed=3 * T * 4,  # read x, read e, write out
        ),
    )(x2, e2)

    # Flat slab back to (B, N, 3); the reshape/slice is layout-free.
    return out2.reshape(T_pad)[:T].reshape(B, N, 3)


if __name__ == "__main__":
    # NOTE: ToneMapper.__init__ defines no learnable parameters (the
    # "Linear_*" members are plain Sigmoid activations), so there is nothing
    # to initialize beyond the inputs.
    key = jax.random.PRNGKey(0)
    k1, k2 = jax.random.split(key)

    B, N = 2, 64  # rays batch x samples
    rgb_h_ln = jax.random.normal(k1, (B, N, 3), dtype=jnp.float32)
    exps = jax.random.normal(k2, (B, N, 1), dtype=jnp.float32)

    out = tonemapper_forward(rgb_h_ln, exps)
    out = jax.block_until_ready(out)

    # Reference check in plain JAX (same semantics as the PyTorch forward).
    ref = jax.nn.sigmoid(rgb_h_ln + exps)  # exps broadcasts over channel dim
    assert out.shape == (B, N, 3)
    assert jnp.allclose(out, ref, atol=1e-6), "mismatch vs reference"

    print("KERNEL_OK")
</pallas_src>

<mosaic_0001>
module attributes {stable_mosaic.version = 11 : i64} {
  func.func @_tonemap_kernel(%arg0: i32, %arg1: memref<8x512xf32, #tpu.memory_space<vmem>>, %arg2: memref<8x512xf32, #tpu.memory_space<vmem>>, %arg3: memref<8x512xf32, #tpu.memory_space<vmem>>) attributes {dimension_semantics = [#tpu.dimension_semantics<parallel>], iteration_bounds = array<i64: 1>, scalar_prefetch = 0 : i64, scratch_operands = 0 : i64, tpu.core_type = #tpu.core_type<tc>, window_params = [{transform_indices = @transform_0, window_bounds = array<i64: 8, 512>}, {transform_indices = @transform_1, window_bounds = array<i64: 8, 512>}, {transform_indices = @transform_2, window_bounds = array<i64: 8, 512>}]} {
    %c0 = arith.constant 0 : index
    %c0_0 = arith.constant 0 : index
    %0 = vector.load %arg1[%c0, %c0_0] : memref<8x512xf32, #tpu.memory_space<vmem>>, vector<8x512xf32>
    %c0_1 = arith.constant 0 : index
    %c0_2 = arith.constant 0 : index
    %1 = vector.load %arg2[%c0_1, %c0_2] : memref<8x512xf32, #tpu.memory_space<vmem>>, vector<8x512xf32>
    %2 = arith.addf %0, %1 : vector<8x512xf32>
    %3 = arith.negf %2 : vector<8x512xf32>
    %4 = math.exp %3 : vector<8x512xf32>
    %cst = arith.constant 1.000000e+00 : f32
    %5 = vector.broadcast %cst : f32 to vector<8x512xf32>
    %6 = arith.addf %5, %4 : vector<8x512xf32>
    %7 = arith.divf %5, %6 : vector<8x512xf32>
    %c0_3 = arith.constant 0 : index
    %c0_4 = arith.constant 0 : index
    %8 = vector.load %arg3[%c0_3, %c0_4] : memref<8x512xf32, #tpu.memory_space<vmem>>, vector<8x512xf32>
    tpu.vector_store %arg3[%c0_3, %c0_4], %7 {strides = array<i32>} : memref<8x512xf32, #tpu.memory_space<vmem>>, vector<8x512xf32>,
    return
  }
  func.func @transform_0(%arg0: i32) -> (i32, i32) {
    %c0_i32 = arith.constant 0 : i32
    %c0_i32_0 = arith.constant 0 : i32
    return %arg0, %c0_i32 : i32, i32
  }
  func.func @transform_1(%arg0: i32) -> (i32, i32) {
    %c0_i32 = arith.constant 0 : i32
    %c0_i32_0 = arith.constant 0 : i32
    return %arg0, %c0_i32 : i32, i32
  }
  func.func @transform_2(%arg0: i32) -> (i32, i32) {
    %c0_i32 = arith.constant 0 : i32
    %c0_i32_0 = arith.constant 0 : i32
    return %arg0, %c0_i32 : i32, i32
  }
}

</mosaic_0001>

<llo_original>
// kernel: tpu_custom_call.1
$region0: #{tpu_custom_call.1}
  #allocation0 [shape = 'u32[]', space=smem, size = 0x4, offset = 0x4, fixed_abs, tag = 'smem constant byte address 0x4 - core index']
  #allocation1 [shape = 'u32[72,128]{1,0:T(1,128)}', space=vmem, size = 0x9000, scoped, tag = 'internal scratch']
  %s0 = inlined_call_operand.hbm [shape: f32[8,512], index: 0, kind: input, shape index: {}]
  %s1 = inlined_call_operand.hbm [shape: f32[8,512], index: 1, kind: input, shape index: {}]
  %s2 = inlined_call_operand.hbm [shape: f32[8,512], index: 2, kind: output, shape index: {}]
  %s3 = sld [smem:[#allocation0]]
  $region26: #{tpu_custom_call.1} parent=0
    _
  %s5 = ssub.s32 1, %s3
  %s6 = scalar_select 0, %s5, %s3
  $region1: #{tpu_custom_call.1} parent=0
    #allocation2 [shape = 'u8[16384]{0}', space=vmem, size = 0x4000, scoped, tag = 'input window, operand 0, single buffered']
    #allocation3 [shape = 's32[1]{0}', space=sflag, size = 0x4, scoped, tag = 'scoped memory for tpu_custom_call.1']
    #allocation4 [shape = 's32[1]{0}', space=sflag, size = 0x4, scoped, tag = 'scoped memory for tpu_custom_call.1']
    #allocation5 [shape = 'u8[16384]{0}', space=vmem, size = 0x4000, scoped, tag = 'input window, operand 1, single buffered']
    #allocation6 [shape = 's32[1]{0}', space=sflag, size = 0x4, scoped, tag = 'scoped memory for tpu_custom_call.1']
    #allocation7 [shape = 'u8[16384]{0}', space=vmem, size = 0x4000, scoped, tag = 'output window, operand 0, single buffered']
    %7 = vsyncpa [#allocation3], 0
    %8 = vsyncpa [#allocation6], 0
    %9 = vsyncpa [#allocation4], 0
    // Predicated region
    $region2: #{tpu_custom_call.1} parent=1 // pred_check
      _
    $region3: #{tpu_custom_call.1} parent=1 // pred_check_branch
      %11 = sbr.rel (0) target = $region5
    $region4: #{tpu_custom_call.1} parent=1 // pred_region
      %13 = vsyncadd [#allocation3], 0
      %s15 = sshll.u32 %s0, 4
      %s16 = int_to_ptr.hbm [resolvable:$true] %s15
      %s17 = sshll.u32 [#allocation2], 4
      %s18 = int_to_ptr.vmem [resolvable:$true] %s17
      %20 = dma.hbm_to_vmem [thread:$0]  %s16, 512, %s18, [#allocation3]
    $region5: #{tpu_custom_call.1} parent=1 // pred_fallthru
      _
    // Predicated region
    $region6: #{tpu_custom_call.1} parent=1 // pred_check
      _
    $region7: #{tpu_custom_call.1} parent=1 // pred_check_branch
      %22 = sbr.rel (0) target = $region9
    $region8: #{tpu_custom_call.1} parent=1 // pred_region
      %24 = vsyncadd [#allocation6], 0
      %s26 = sshll.u32 %s1, 4
      %s27 = int_to_ptr.hbm [resolvable:$true] %s26
      %s28 = sshll.u32 [#allocation5], 4
      %s29 = int_to_ptr.vmem [resolvable:$true] %s28
      %31 = dma.hbm_to_vmem [thread:$0]  %s27, 512, %s29, [#allocation6]
    $region9: #{tpu_custom_call.1} parent=1 // pred_fallthru
      _
    // Predicated region
    $region10: #{tpu_custom_call.1} parent=1 // pred_check
      _
    $region11: #{tpu_custom_call.1} parent=1 // pred_check_branch
      %33 = sbr.rel (0) target = $region13
    $region12: #{tpu_custom_call.1} parent=1 // pred_region
      %35 = dma.done [#allocation3], 512
    $region13: #{tpu_custom_call.1} parent=1 // pred_fallthru
      _
    // Predicated region
    $region14: #{tpu_custom_call.1} parent=1 // pred_check
      _
    $region15: #{tpu_custom_call.1} parent=1 // pred_check_branch
      %37 = sbr.rel (0) target = $region17
    $region16: #{tpu_custom_call.1} parent=1 // pred_region
      %39 = dma.done [#allocation6], 512
    $region17: #{tpu_custom_call.1} parent=1 // pred_fallthru
      _
    %v40 = vld [vmem:[#allocation2] sm:$0xff]
    %v41 = vld [vmem:[#allocation2 + $0x8] sm:$0xff]
    %v42 = vld [vmem:[#allocation2 + $0x10] sm:$0xff]
    %v43 = vld [vmem:[#allocation2 + $0x18] sm:$0xff]
    %v44 = vld [vmem:[#allocation5] sm:$0xff]
    %v45 = vld [vmem:[#allocation5 + $0x8] sm:$0xff]
    %v46 = vld [vmem:[#allocation5 + $0x10] sm:$0xff]
    %v47 = vld [vmem:[#allocation5 + $0x18] sm:$0xff]
    %v48 = vadd.f32 %v40, %v44
    %v49 = vadd.f32 %v41, %v45
    %v50 = vadd.f32 %v42, %v46
    %v51 = vadd.f32 %v43, %v47
    %v52 = vxor.u32 %v48, 2147483648
    %v53 = vxor.u32 %v49, 2147483648
    %v54 = vxor.u32 %v50, 2147483648
    %v55 = vxor.u32 %v51, 2147483648
    %v56 = vmul.f32 %v52, 1.442695
    %v57 = vpow.pop %v56
    %v58 = vmul.f32 %v53, 1.442695
    %v59 = vpow.pop %v58
    %v60 = vmul.f32 %v54, 1.442695
    %v61 = vpow.pop %v60
    %v62 = vmul.f32 %v55, 1.442695
    %v63 = vpow.pop %v62
    %v64 = vadd.f32 %v57, 1.0
    %v65 = vadd.f32 %v59, 1.0
    %v66 = vadd.f32 %v61, 1.0
    %v67 = vadd.f32 %v63, 1.0
    %v68 = vrcp.pop %v64
    %v69 = vmul.f32 %v64, %v68
    %v70 = vsub.f32 1.0, %v69
    %v71 = vmul.f32 %v68, %v70
    %v72 = vadd.f32 %v68, %v71
    %vm73 = vweird.f32 %v64
    %vm74 = vweird.f32 %v68
    %vm75 = vmor %vm73, %vm74
    %v76 = vsel %vm75, %v68, %v72
    %v77 = vand.u32 2147483647, %v64
    %vm78 = vcmp.eq.f32.partialorder %v77, 8.507059e+37
    %v79 = vand.u32 %v64, 2147483648
    %v80 = vor.u32 1.1754944e-38, %v79
    %v81 = vsel %vm78, %v80, %v76
    %v82 = vmul.f32 1.0, %v81
    %v83 = vrcp.pop %v65
    %v84 = vmul.f32 %v65, %v83
    %v85 = vsub.f32 1.0, %v84
    %v86 = vmul.f32 %v83, %v85
    %v87 = vadd.f32 %v83, %v86
    %vm88 = vweird.f32 %v65
    %vm89 = vweird.f32 %v83
    %vm90 = vmor %vm88, %vm89
    %v91 = vsel %vm90, %v83, %v87
    %v92 = vand.u32 2147483647, %v65
    %vm93 = vcmp.eq.f32.partialorder %v92, 8.507059e+37
    %v94 = vand.u32 %v65, 2147483648
    %v95 = vor.u32 1.1754944e-38, %v94
    %v96 = vsel %vm93, %v95, %v91
    %v97 = vmul.f32 1.0, %v96
    %v98 = vrcp.pop %v66
    %v99 = vmul.f32 %v66, %v98
    %v100 = vsub.f32 1.0, %v99
    %v101 = vmul.f32 %v98, %v100
    %v102 = vadd.f32 %v98, %v101
    %vm103 = vweird.f32 %v66
    %vm104 = vweird.f32 %v98
    %vm105 = vmor %vm103, %vm104
    %v106 = vsel %vm105, %v98, %v102
    %v107 = vand.u32 2147483647, %v66
    %vm108 = vcmp.eq.f32.partialorder %v107, 8.507059e+37
    %v109 = vand.u32 %v66, 2147483648
    %v110 = vor.u32 1.1754944e-38, %v109
    %v111 = vsel %vm108, %v110, %v106
    %v112 = vmul.f32 1.0, %v111
    %v113 = vrcp.pop %v67
    %v114 = vmul.f32 %v67, %v113
    %v115 = vsub.f32 1.0, %v114
    %v116 = vmul.f32 %v113, %v115
    %v117 = vadd.f32 %v113, %v116
    %vm118 = vweird.f32 %v67
    %vm119 = vweird.f32 %v113
    %vm120 = vmor %vm118, %vm119
    %v121 = vsel %vm120, %v113, %v117
    %v122 = vand.u32 2147483647, %v67
    %vm123 = vcmp.eq.f32.partialorder %v122, 8.507059e+37
    %v124 = vand.u32 %v67, 2147483648
    %v125 = vor.u32 1.1754944e-38, %v124
    %v126 = vsel %vm123, %v125, %v121
    %v127 = vmul.f32 1.0, %v126
    %128 = vst [vmem:[#allocation7] sm:$0xff] %v82
    %129 = vst [vmem:[#allocation7 + $0x8] sm:$0xff] %v97
    %130 = vst [vmem:[#allocation7 + $0x10] sm:$0xff] %v112
    %131 = vst [vmem:[#allocation7 + $0x18] sm:$0xff] %v127
    // Predicated region
    $region18: #{tpu_custom_call.1} parent=1 // pred_check
      _
    $region19: #{tpu_custom_call.1} parent=1 // pred_check_branch
      %133 = sbr.rel (0) target = $region21
    $region20: #{tpu_custom_call.1} parent=1 // pred_region
      %135 = vsyncadd [#allocation4], 0
      %s137 = sshll.u32 [#allocation7], 4
      %s138 = int_to_ptr.vmem [resolvable:$true] %s137
      %s139 = sshll.u32 %s2, 4
      %s140 = int_to_ptr.hbm [resolvable:$true] %s139
      %142 = dma.vmem_to_hbm [thread:$0]  %s138, 512, %s140, [#allocation4]
    $region21: #{tpu_custom_call.1} parent=1 // pred_fallthru
      _
    // Predicated region
    $region22: #{tpu_custom_call.1} parent=1 // pred_check
      _
    $region23: #{tpu_custom_call.1} parent=1 // pred_check_branch
      %144 = sbr.rel (0) target = $region25
    $region24: #{tpu_custom_call.1} parent=1 // pred_region
      %146 = dma.done [#allocation4], 512
    $region25: #{tpu_custom_call.1} parent=1 // pred_fallthru
      _
    %147 = vsyncpa [#allocation3], 1
    %148 = vsyncpa [#allocation6], 1
    %149 = vsyncpa [#allocation4], 1

</llo_original>
